<compile_context>
chip_gen: v5e
topology: v5e:2x2
jax: 0.10.0
libtpu: 0.0.40
codegen_flags: <defaults>
</compile_context>

<pallas_src>
import jax
import jax.numpy as jnp
from jax.experimental import pallas as pl
from jax.experimental.pallas import tpu as pltpu


def _round_up(x, m):
    return ((x + m - 1) // m) * m


def _linear_kernel(x_ref, w_ref, b_ref, o_ref):
    # x_ref: (TM, D) VMEM    w_ref: (1, D) VMEM (resident across the grid)
    # b_ref: (1, 1) SMEM     o_ref: (1, TM) VMEM (lane-dense)
    x = x_ref[...].astype(jnp.float32)
    w = w_ref[...].astype(jnp.float32)
    s = jnp.sum(x * w, axis=1)              # VPU mul + XLU lane-reduce -> (TM,)
    o_ref[...] = (s + b_ref[0, 0])[None, :].astype(o_ref.dtype)


def linear_forward(x, weight, bias, *, tm=1024, vmem_budget_bytes=16 * 1024 * 1024):
    """y = x @ weight.T + bias.  weight: (1, D), bias: (1,)  ->  (B, 1)."""
    B, D = x.shape
    weight = weight.reshape(1, D)

    # Cap the tile so the two double-buffered (TM, D) x-tiles fit the VMEM budget.
    itemsize = jnp.dtype(x.dtype).itemsize
    max_tm = max(8, (vmem_budget_bytes // (2 * D * itemsize)) // 8 * 8)
    tm = max(8, min(int(tm), max_tm))
    tm = min(tm, _round_up(B, 8))

    # Pad the batch so TM divides it; padded rows are sliced off at the end.
    b_pad = _round_up(B, tm)
    if b_pad != B:
        x = jnp.pad(x, ((0, b_pad - B), (0, 0)))
    num_tiles = b_pad // tm

    b2d = bias.reshape(1, 1).astype(jnp.float32)

    out = pl.pallas_call(
        _linear_kernel,
        out_shape=jax.ShapeDtypeStruct((num_tiles, tm), x.dtype),
        grid=(num_tiles,),
        in_specs=[
            # x: one (TM, D) tile per grid step, streamed & double-buffered.
            pl.BlockSpec((tm, D), lambda i: (i, 0)),
            # weight: same block every step -> stays resident in VMEM.
            pl.BlockSpec((1, D), lambda i: (0, 0)),
            # bias: scalar in SMEM (whole array, no blocking).
            pl.BlockSpec(memory_space=pltpu.MemorySpace.SMEM),
        ],
        # Lane-dense output slab; reshaped to (B, 1) in the wrapper.
        out_specs=pl.BlockSpec((1, tm), lambda i: (i, 0)),
        compiler_params=pltpu.CompilerParams(
            dimension_semantics=("parallel",),
        ),
    )(x, weight, b2d)

    return out.reshape(b_pad, 1)[:B]


if __name__ == "__main__":
    key = jax.random.PRNGKey(0)
    kx, kw, kb = jax.random.split(key, 3)

    # Small shapes consistent with the module: batch=64, input_size=32.
    batch = 64
    input_size = 32

    x = jax.random.normal(kx, (batch, input_size), dtype=jnp.float32)
    bound = 1.0 / (input_size ** 0.5)
    weight = jax.random.uniform(kw, (1, input_size), minval=-bound, maxval=bound,
                                dtype=jnp.float32)
    bias = jax.random.uniform(kb, (1,), minval=-bound, maxval=bound,
                              dtype=jnp.float32)

    out = jax.block_until_ready(linear_forward(x, weight, bias))
    ref = x @ weight.T + bias
    assert out.shape == (batch, 1)
    assert jnp.allclose(out, ref, atol=1e-5, rtol=1e-5), "mismatch vs reference"

    # Multi-tile path with padding (batch=40 rows, tm=16 -> 3 tiles, 8 pad rows).
    x_s = jax.random.normal(kx, (40, input_size), dtype=jnp.float32)
    out_s = jax.block_until_ready(linear_forward(x_s, weight, bias, tm=16))
    ref_s = x_s @ weight.T + bias
    assert out_s.shape == (40, 1)
    assert jnp.allclose(out_s, ref_s, atol=1e-5, rtol=1e-5), "mismatch vs reference (tiled)"

    print("KERNEL_OK")
</pallas_src>

<mosaic_0001>
module attributes {stable_mosaic.version = 11 : i64} {
  func.func @_linear_kernel(%arg0: i32, %arg1: memref<64x32xf32, #tpu.memory_space<vmem>>, %arg2: memref<1x32xf32, #tpu.memory_space<vmem>>, %arg3: memref<1x1xf32, #tpu.memory_space<smem>>, %arg4: memref<1x64xf32, #tpu.memory_space<vmem>>) attributes {dimension_semantics = [#tpu.dimension_semantics<parallel>], iteration_bounds = array<i64: 1>, scalar_prefetch = 0 : i64, scratch_operands = 0 : i64, tpu.core_type = #tpu.core_type<tc>, window_params = [{transform_indices = @transform_0, window_bounds = array<i64: 64, 32>}, {pipeline_mode = #tpu.pipeline_mode<synchronous>, transform_indices = @transform_1, window_bounds = array<i64: 1, 32>}, {transform_indices = @transform_2, window_bounds = array<i64: 1, 1>}, {transform_indices = @transform_3, window_bounds = array<i64: 1, 64>}]} {
    %c0 = arith.constant 0 : index
    %c0_0 = arith.constant 0 : index
    %0 = vector.load %arg1[%c0, %c0_0] : memref<64x32xf32, #tpu.memory_space<vmem>>, vector<64x32xf32>
    %c0_1 = arith.constant 0 : index
    %c0_2 = arith.constant 0 : index
    %1 = vector.load %arg2[%c0_1, %c0_2] : memref<1x32xf32, #tpu.memory_space<vmem>>, vector<1x32xf32>
    %2 = vector.broadcast %1 : vector<1x32xf32> to vector<64x32xf32>
    %3 = arith.mulf %0, %2 : vector<64x32xf32>
    %cst = arith.constant dense<0.000000e+00> : vector<64xf32>
    %4 = vector.multi_reduction <add>, %3, %cst [1] : vector<64x32xf32> to vector<64xf32>
    %c0_3 = arith.constant 0 : index
    %c0_4 = arith.constant 0 : index
    %5 = memref.load %arg3[%c0_3, %c0_4] : memref<1x1xf32, #tpu.memory_space<smem>>
    %6 = vector.broadcast %5 : f32 to vector<64xf32>
    %7 = arith.addf %4, %6 : vector<64xf32>
    %8 = vector.shape_cast %7 : vector<64xf32> to vector<1x64xf32>
    %c0_5 = arith.constant 0 : index
    %c0_6 = arith.constant 0 : index
    %9 = vector.load %arg4[%c0_5, %c0_6] : memref<1x64xf32, #tpu.memory_space<vmem>>, vector<1x64xf32>
    tpu.vector_store %arg4[%c0_5, %c0_6], %8 {strides = array<i32>} : memref<1x64xf32, #tpu.memory_space<vmem>>, vector<1x64xf32>,
    return
  }
  func.func @transform_0(%arg0: i32) -> (i32, i32) {
    %c0_i32 = arith.constant 0 : i32
    %c0_i32_0 = arith.constant 0 : i32
    return %arg0, %c0_i32 : i32, i32
  }
  func.func @transform_1(%arg0: i32) -> (i32, i32) {
    %c0_i32 = arith.constant 0 : i32
    %c0_i32_0 = arith.constant 0 : i32
    %c0_i32_1 = arith.constant 0 : i32
    return %c0_i32, %c0_i32_0 : i32, i32
  }
  func.func @transform_2(%arg0: i32) -> (i32, i32) {
    %c0_i32 = arith.constant 0 : i32
    %c0_i32_0 = arith.constant 0 : i32
    %c0_i32_1 = arith.constant 0 : i32
    return %c0_i32, %c0_i32_0 : i32, i32
  }
  func.func @transform_3(%arg0: i32) -> (i32, i32) {
    %c0_i32 = arith.constant 0 : i32
    %c0_i32_0 = arith.constant 0 : i32
    return %arg0, %c0_i32 : i32, i32
  }
}

</mosaic_0001>

<llo_original>
// kernel: tpu_custom_call.1
$region0: #{tpu_custom_call.1}
  #allocation0 [shape = 'u32[]', space=smem, size = 0x4, offset = 0x4, fixed_abs, tag = 'smem constant byte address 0x4 - core index']
  #allocation1 [shape = 'u32[72,128]{1,0:T(1,128)}', space=vmem, size = 0x9000, scoped, tag = 'internal scratch']
  #allocation2 [shape = 'f32[1,1]{1,0:T(1,128)S(6)}', space=smem, size = 0x200, scoped, tag = 'scoped memory for tpu_custom_call.1']
  %s0 = inlined_call_operand.vmem [shape: f32[64,32], index: 0, kind: input, shape index: {}]
  %s1 = inlined_call_operand.vmem [shape: f32[1,32], index: 1, kind: input, shape index: {}]
  %s2 = inlined_call_operand.<no memory space> [shape: f32[1,1], index: 2, kind: input, shape index: {}]
  %s3 = inlined_call_operand.hbm [shape: f32[1,64], index: 3, kind: output, shape index: {}]
  %s4 = sld [smem:[#allocation0]]
  $region22: #{tpu_custom_call.1} parent=0
    _
  %s6 = ssub.s32 1, %s4
  %s7 = scalar_select 0, %s6, %s4
  %8 = sst [smem:[#allocation2]] %s2
  $region1: #{tpu_custom_call.1} parent=0
    #allocation3 [shape = 'u8[512]{0}', space=vmem, size = 0x400, scoped, tag = 'output window, operand 0, single buffered']
    #allocation4 [shape = 's32[1]{0}', space=sflag, size = 0x4, scoped, tag = 'scoped memory for tpu_custom_call.1']
    %9 = vsyncpa [#allocation4], 0
    // Predicated region
    $region2: #{tpu_custom_call.1} parent=1 // pred_check
      _
    $region3: #{tpu_custom_call.1} parent=1 // pred_check_branch
      %11 = sbr.rel (0) target = $region5
    $region4: #{tpu_custom_call.1} parent=1 // pred_region
      _
    $region5: #{tpu_custom_call.1} parent=1 // pred_fallthru
      _
    // Predicated region
    $region6: #{tpu_custom_call.1} parent=1 // pred_check
      _
    $region7: #{tpu_custom_call.1} parent=1 // pred_check_branch
      %13 = sbr.rel (0) target = $region9
    $region8: #{tpu_custom_call.1} parent=1 // pred_region
      _
    $region9: #{tpu_custom_call.1} parent=1 // pred_fallthru
      _
    // Predicated region
    $region10: #{tpu_custom_call.1} parent=1 // pred_check
      _
    $region11: #{tpu_custom_call.1} parent=1 // pred_check_branch
      %15 = sbr.rel (0) target = $region13
    $region12: #{tpu_custom_call.1} parent=1 // pred_region
      _
    $region13: #{tpu_custom_call.1} parent=1 // pred_fallthru
      _
    %v16 = vld [vmem:[%s0] sm:$0xff]
    %v17 = vld [vmem:[%s0 + $0x8] sm:$0xff]
    %v18 = vld [vmem:[%s0 + $0x10] sm:$0xff]
    %v19 = vld [vmem:[%s0 + $0x18] sm:$0xff]
    %v20 = vld [vmem:[%s0 + $0x20] sm:$0xff]
    %v21 = vld [vmem:[%s0 + $0x28] sm:$0xff]
    %v22 = vld [vmem:[%s0 + $0x30] sm:$0xff]
    %v23 = vld [vmem:[%s0 + $0x38] sm:$0xff]
    %v24 = vld [vmem:[%s1] sm:$0x1]
    %v26 = vperm.slane %v24, 0
    %v28 = vmul.f32 %v16, %v26
    %v29 = vmul.f32 %v17, %v26
    %v30 = vmul.f32 %v18, %v26
    %v31 = vmul.f32 %v19, %v26
    %v32 = vmul.f32 %v20, %v26
    %v33 = vmul.f32 %v21, %v26
    %v34 = vmul.f32 %v22, %v26
    %v35 = vmul.f32 %v23, %v26
    %vm36 = vcmask 261120
    %v37 = vsel %vm36, %v28, 0.0
    %38 = vadd.xlane.f32.xlu0 %v37
    %v39 = vpop.xlane.xlu0 %38
    %v40 = vsel %vm36, %v29, 0.0
    %41 = vadd.xlane.f32.xlu0 %v40
    %v42 = vpop.xlane.xlu0 %41
    %v43 = vsel %vm36, %v30, 0.0
    %44 = vadd.xlane.f32.xlu0 %v43
    %v45 = vpop.xlane.xlu0 %44
    %v46 = vsel %vm36, %v31, 0.0
    %47 = vadd.xlane.f32.xlu0 %v46
    %v48 = vpop.xlane.xlu0 %47
    %v49 = vsel %vm36, %v32, 0.0
    %50 = vadd.xlane.f32.xlu0 %v49
    %v51 = vpop.xlane.xlu0 %50
    %v52 = vsel %vm36, %v33, 0.0
    %53 = vadd.xlane.f32.xlu0 %v52
    %v54 = vpop.xlane.xlu0 %53
    %v55 = vsel %vm36, %v34, 0.0
    %56 = vadd.xlane.f32.xlu0 %v55
    %v57 = vpop.xlane.xlu0 %56
    %v58 = vsel %vm36, %v35, 0.0
    %59 = vadd.xlane.f32.xlu0 %v58
    %v60 = vpop.xlane.xlu0 %59
    %s61 = sld [smem:[#allocation2]]
    %v62 = vstv %s61
    %v63 = vadd.f32 %v39, %v62
    %v64 = vadd.f32 %v42, %v62
    %v65 = vadd.f32 %v45, %v62
    %v66 = vadd.f32 %v48, %v62
    %v67 = vadd.f32 %v51, %v62
    %v68 = vadd.f32 %v54, %v62
    %v69 = vadd.f32 %v57, %v62
    %v70 = vadd.f32 %v60, %v62
    %v79 = vlaneseq
    %v80 = vand.u32 %v79, 127
    %v81 = vperm.slane %v63, %v80
    %v82 = vadd.s32 %v80, 4294967288
    %v83 = vperm.slane %v64, %v82
    %vm84 = vcmask 130112
    %v85 = vsel %vm84, %v83, %v81
    %v86 = vadd.s32 %v80, 4294967280
    %v87 = vperm.slane %v65, %v86
    %vm88 = vcmask 195712
    %v89 = vsel %vm88, %v87, %v85
    %v90 = vadd.s32 %v80, 4294967272
    %v91 = vperm.slane %v66, %v90
    %vm92 = vcmask 261312
    %v93 = vsel %vm92, %v91, %v89
    %v94 = vadd.s32 %v80, 4294967264
    %v95 = vperm.slane %v67, %v94
    %vm96 = vcmask 326912
    %v97 = vsel %vm96, %v95, %v93
    %v98 = vadd.s32 %v80, 4294967256
    %v99 = vperm.slane %v68, %v98
    %vm100 = vcmask 392512
    %v101 = vsel %vm100, %v99, %v97
    %v102 = vadd.s32 %v80, 4294967248
    %v103 = vperm.slane %v69, %v102
    %vm104 = vcmask 458112
    %v105 = vsel %vm104, %v103, %v101
    %v106 = vadd.s32 %v80, 4294967240
    %v107 = vperm.slane %v70, %v106
    %vm108 = vcmask 523712
    %v109 = vsel %vm108, %v107, %v105
    %vm111 = vcmask 516096
    %112 = vst.msk [vmem:[#allocation3] sm:$0x1] %vm111, %v109
    // Predicated region
    $region14: #{tpu_custom_call.1} parent=1 // pred_check
      _
    $region15: #{tpu_custom_call.1} parent=1 // pred_check_branch
      %114 = sbr.rel (0) target = $region17
    $region16: #{tpu_custom_call.1} parent=1 // pred_region
      %116 = vsyncadd [#allocation4], 0
      %s118 = sshll.u32 [#allocation3], 4
      %s119 = int_to_ptr.vmem [resolvable:$true] %s118
      %s120 = sshll.u32 %s3, 4
      %s121 = int_to_ptr.hbm [resolvable:$true] %s120
      %123 = dma.vmem_to_hbm [thread:$0]  %s119, 16, %s121, [#allocation4]
    $region17: #{tpu_custom_call.1} parent=1 // pred_fallthru
      _
    // Predicated region
    $region18: #{tpu_custom_call.1} parent=1 // pred_check
      _
    $region19: #{tpu_custom_call.1} parent=1 // pred_check_branch
      %125 = sbr.rel (0) target = $region21
    $region20: #{tpu_custom_call.1} parent=1 // pred_region
      %127 = dma.done [#allocation4], 16
    $region21: #{tpu_custom_call.1} parent=1 // pred_fallthru
      _
    %128 = vsyncpa [#allocation4], 1

</llo_original>
